<compile_context>
chip_gen: v7x
topology: tpu7x:2x2x1
jax: 0.10.0
libtpu: 0.0.40
codegen_flags: <defaults>
</compile_context>

<pallas_src>
import functools

import jax
import jax.numpy as jnp
from jax import lax
from jax.experimental import pallas as pl
from jax.experimental.pallas import tpu as pltpu

_EPS = 1e-5
_BUDGETS = None


def _round_up(x, m):
    return (x + m - 1) // m * m


def _budgets():
    """(vmem_limit_bytes, per-block byte budget) -- generation aware."""
    global _BUDGETS
    if _BUDGETS is None:
        try:
            cap = int(pltpu.get_tpu_info().vmem_capacity_bytes)
        except Exception:
            cap = 64 * 1024 * 1024
        if cap >= 96 * 1024 * 1024:          # 128 MiB parts (v5e / v6e)
            _BUDGETS = (96 * 1024 * 1024, 4 * 1024 * 1024)
        else:                                # 64 MiB parts (v7x)
            _BUDGETS = (48 * 1024 * 1024, 2 * 1024 * 1024)
    return _BUDGETS


def _cp(sem):
    return pltpu.CompilerParams(dimension_semantics=sem,
                                vmem_limit_bytes=_budgets()[0])


def _pick_row_tile(H, Wp, C, budget):
    """Largest divisor tR of H whose (tR*Wp, C) f32 block is layout-legal and
    fits the per-block budget."""
    for t in range(H, 0, -1):
        if H % t:
            continue
        if t * Wp * C * 4 > budget:
            continue
        if t == H or (t * Wp) % 8 == 0:
            return t
    return H


def _stats_col_mask(rows, pitch, lo, hi):
    """(1, rows*pitch, 1) f32 mask selecting columns [lo, hi) of each row.
    Tiny (~L*4 bytes per tile); only used to exclude pad/junk columns from the
    fused BN statistics."""
    col = jnp.arange(pitch)
    row = jnp.where((col >= lo) & (col < hi), 1.0, 0.0).astype(jnp.float32)
    return jnp.tile(row, rows).reshape(1, rows * pitch, 1)


# ---------------------------------------------------------------------------
# Pallas kernels
# ---------------------------------------------------------------------------
def _matmul_bias_kernel(a_ref, b_ref, bias_ref, o_ref, acc_ref):
    """Tiled (M,K)@(K,N) on the MXU; bf16 inputs, f32 accumulation, bias folded
    into the accumulator init."""
    @pl.when(pl.program_id(2) == 0)
    def _init():
        acc_ref[...] = jnp.broadcast_to(bias_ref[...], acc_ref.shape)

    acc_ref[...] += jnp.dot(a_ref[...], b_ref[...],
                            preferred_element_type=jnp.float32)

    @pl.when(pl.program_id(2) == pl.num_programs(2) - 1)
    def _fin():
        o_ref[...] = acc_ref[...].astype(o_ref.dtype)


def _conv_taps_kernel(x_ref, w_ref, b_ref, m_ref, o_ref, st_ref, *, taps, row_tiled):
    """Implicit-GEMM convolution over a static tap list + fused BN statistics.

    x_ref : (1, P, Lf, Cin) bf16  flat (phase) slabs of one padded image
    w_ref : (T, Cin, Cout)  bf16
    b_ref : (1, Cout)       f32
    m_ref : (1, L, 1)       f32   valid-column mask (stats only)
    o_ref : (1, L, Cout)    f32   conv output row-tile (pitched layout)
    st_ref: (1, 1, 2, Cout) f32   per-(image,row-tile) (sum, sum of squares)
    """
    L = o_ref.shape[1]
    # Bias-init then accumulate each tap matmul directly into the output block
    # (no duplicate accumulator scratch).
    o_ref[0] = jnp.broadcast_to(b_ref[...], o_ref.shape[1:])
    for ph, off, t in taps:
        if row_tiled:
            sl = pl.ds(pl.program_id(1) * L + off, L)
        else:
            sl = slice(off, off + L)
        o_ref[0] += jnp.dot(x_ref[0, ph, sl, :], w_ref[t],
                            preferred_element_type=jnp.float32)
    y = o_ref[0]
    ym = y * m_ref[0]
    st_ref[0, 0] = jnp.concatenate(
        [jnp.sum(ym, axis=0, keepdims=True),
         jnp.sum(ym * y, axis=0, keepdims=True)], axis=0)


def _affine_relu_kernel(x_ref, s_ref, b_ref, o_ref, *, Ho, Wo, c0):
    """y = relu(x*scale + shift); writes the bf16 stored layout (halos zeroed
    with static-slice stores instead of a mask multiply)."""
    C = o_ref.shape[3]
    z2 = jnp.zeros((2, Wo + 2, C), o_ref.dtype)
    z1 = jnp.zeros((Ho, 1, C), o_ref.dtype)
    x = x_ref[0, :, c0:c0 + Wo, :].astype(jnp.float32)
    y = jnp.maximum(x * s_ref[...] + b_ref[...], 0.0).astype(o_ref.dtype)
    o_ref[0, 0:2, :, :] = z2
    o_ref[0, Ho + 2:Ho + 4, :, :] = z2
    o_ref[0, 2:Ho + 2, 0:1, :] = z1
    o_ref[0, 2:Ho + 2, Wo + 1:Wo + 2, :] = z1
    o_ref[0, 2:Ho + 2, 1:Wo + 1, :] = y


def _bn_add_relu_kernel(h_ref, s2_ref, b2_ref, sc_ref, ss_ref, bs_ref, o_ref, *,
                        Ho, Wo, ch0, rs0, cs0):
    """out = relu(relu(h*s2+b2) + (sc*ss+bs)); BN2, shortcut BN and residual add
    fused; writes the bf16 stored layout directly."""
    C = o_ref.shape[3]
    z2 = jnp.zeros((2, Wo + 2, C), o_ref.dtype)
    z1 = jnp.zeros((Ho, 1, C), o_ref.dtype)
    h = h_ref[0, :, ch0:ch0 + Wo, :].astype(jnp.float32)
    sc = sc_ref[0, rs0:rs0 + Ho, cs0:cs0 + Wo, :].astype(jnp.float32)
    y = jnp.maximum(h * s2_ref[...] + b2_ref[...], 0.0)
    y = jnp.maximum(y + sc * ss_ref[...] + bs_ref[...], 0.0).astype(o_ref.dtype)
    o_ref[0, 0:2, :, :] = z2
    o_ref[0, Ho + 2:Ho + 4, :, :] = z2
    o_ref[0, 2:Ho + 2, 0:1, :] = z1
    o_ref[0, 2:Ho + 2, Wo + 1:Wo + 2, :] = z1
    o_ref[0, 2:Ho + 2, 1:Wo + 1, :] = y


def _maxpool_kernel(p00_ref, p01_ref, p10_ref, p11_ref, o_ref, st_ref, *, H2, W2):
    """3x3 / stride-2 max pool as a running max over stride-phase views, with
    fused per-channel (sum, sumsq) for the following BatchNorm."""
    refs = ((p00_ref, p01_ref), (p10_ref, p11_ref))
    out = None
    for di in range(3):
        for dj in range(3):
            r = refs[di % 2][dj % 2]
            v = r[0, di // 2:di // 2 + H2, dj // 2:dj // 2 + W2, :]
            out = v if out is None else jnp.maximum(out, v)
    s = jnp.sum(out, axis=0)          # (W2, C)
    sq = jnp.sum(out * out, axis=0)
    st_ref[0] = jnp.concatenate([jnp.sum(s, axis=0, keepdims=True),
                                 jnp.sum(sq, axis=0, keepdims=True)], axis=0)
    o_ref[0] = out.astype(o_ref.dtype)


# ---------------------------------------------------------------------------
# Kernel wrappers
# ---------------------------------------------------------------------------
def matmul_bias(a, b, bias):
    """(M,K)@(K,N) + bias with bf16 MXU inputs and f32 accumulation."""
    M, K = a.shape
    _, N = b.shape
    tm = min(256, _round_up(M, 8))
    tn = min(256, _round_up(N, 128))
    kr = _round_up(K, 128)
    tk = kr if kr <= 2304 else 512
    Mp, Kp, Np = _round_up(M, tm), _round_up(K, tk), _round_up(N, tn)
    a_p = jnp.pad(a.astype(jnp.bfloat16), ((0, Mp - M), (0, Kp - K)))
    b_p = jnp.pad(b.astype(jnp.bfloat16), ((0, Kp - K), (0, Np - N)))
    bias_p = jnp.pad(bias.reshape(1, N).astype(jnp.float32), ((0, 0), (0, Np - N)))
    out = pl.pallas_call(
        _matmul_bias_kernel,
        out_shape=jax.ShapeDtypeStruct((Mp, Np), jnp.float32),
        grid_spec=pltpu.PrefetchScalarGridSpec(
            num_scalar_prefetch=0,
            grid=(Mp // tm, Np // tn, Kp // tk),
            in_specs=[pl.BlockSpec((tm, tk), lambda i, j, k: (i, k)),
                      pl.BlockSpec((tk, tn), lambda i, j, k: (k, j)),
                      pl.BlockSpec((1, tn), lambda i, j, k: (0, j))],
            out_specs=pl.BlockSpec((tm, tn), lambda i, j, k: (i, j)),
            scratch_shapes=[pltpu.VMEM((tm, tn), jnp.float32)]),
        compiler_params=_cp(("parallel", "parallel", "arbitrary")),
    )(a_p, b_p, bias_p)
    return out[:M, :N]


def _im2col(x, kh, kw, stride, pad):
    N, H, W, C = x.shape
    xp = jnp.pad(x, ((0, 0), (pad, pad), (pad, pad), (0, 0))).astype(jnp.bfloat16)
    Ho = (H + 2 * pad - kh) // stride + 1
    Wo = (W + 2 * pad - kw) // stride + 1
    cols = []
    for i in range(kh):
        for j in range(kw):
            cols.append(xp[:, i:i + stride * Ho:stride, j:j + stride * Wo:stride, :])
    patches = jnp.stack(cols, axis=3)          # (N, Ho, Wo, kh*kw, C) bf16
    return patches.reshape(N * Ho * Wo, kh * kw * C), Ho, Wo


def conv2d_im2col(x, w, b, *, stride, pad):
    """Used only for the 7x7/s2 stem (Cin=3: im2col gives a K=147 GEMM which
    fills the MXU far better than 49 K=3 tap matmuls; the blowup is tiny)."""
    kh, kw, cin, cout = w.shape
    N = x.shape[0]
    patches, Ho, Wo = _im2col(x, kh, kw, stride, pad)
    out = matmul_bias(patches, w.reshape(kh * kw * cin, cout), b)
    return out.reshape(N, Ho, Wo, cout)


def _conv_taps(x_ph, w_flat, bias, taps, Ho, Wpc, Cout, stats_mask):
    """Shared implicit-GEMM conv launcher: grid (N, row_tiles), both parallel."""
    N, P, Lf, Cin = x_ph.shape
    T = w_flat.shape[0]
    tR = _pick_row_tile(Ho, Wpc, Cout, _budgets()[1])
    nR = Ho // tR
    L = tR * Wpc
    out, st = pl.pallas_call(
        functools.partial(_conv_taps_kernel, taps=tuple(taps), row_tiled=(nR > 1)),
        out_shape=(jax.ShapeDtypeStruct((N, Ho * Wpc, Cout), jnp.float32),
                   jax.ShapeDtypeStruct((N, nR, 2, Cout), jnp.float32)),
        grid_spec=pltpu.PrefetchScalarGridSpec(
            num_scalar_prefetch=0,
            grid=(N, nR),
            in_specs=[
                pl.BlockSpec((1, P, Lf, Cin), lambda n, r: (n, 0, 0, 0)),
                pl.BlockSpec((T, Cin, Cout), lambda n, r: (0, 0, 0)),
                pl.BlockSpec((1, Cout), lambda n, r: (0, 0)),
                pl.BlockSpec((1, L, 1), lambda n, r: (0, r, 0)),
            ],
            out_specs=[
                pl.BlockSpec((1, L, Cout), lambda n, r: (n, r, 0)),
                pl.BlockSpec((1, 1, 2, Cout), lambda n, r: (n, r, 0, 0)),
            ]),
        compiler_params=_cp(("parallel", "parallel")),
    )(x_ph, w_flat, bias.reshape(1, Cout).astype(jnp.float32), stats_mask)
    return out, jnp.sum(st, axis=(0, 1))


def conv3x3_s1_stored(x_st, w, b):
    """3x3/s1/p1 conv directly on the bf16 stored activation (N, H+4, W+2, Cin).
    Returns (out (N,H,W+2,Cout) f32, bn_stats (2,Cout))."""
    N, Hp4, Wp, Cin = x_st.shape
    H, W = Hp4 - 4, Wp - 2
    Cout = w.shape[-1]
    x_ph = x_st.astype(jnp.bfloat16).reshape(N, 1, Hp4 * Wp, Cin)   # free reshape
    w_flat = w.reshape(9, Cin, Cout).astype(jnp.bfloat16)
    taps = tuple((0, (di + 1) * Wp + dj - 1, di * 3 + dj)
                 for di in range(3) for dj in range(3))
    mask = _stats_col_mask(H, Wp, 1, W + 1)
    out, stats = _conv_taps(x_ph, w_flat, b, taps, H, Wp, Cout, mask)
    return out.reshape(N, H, Wp, Cout), stats


def conv_s2(x_real, w, b, *, pad):
    """k x k / stride-2 conv via 4 stride-phase slabs (no im2col blowup).
    Returns (out (N,Ho,Wpc,Cout) f32 with interior cols [0,Wo), bn_stats, Ho, Wo)."""
    N, H, W, Cin = x_real.shape
    k = w.shape[0]
    Cout = w.shape[-1]
    Ho = (H + 2 * pad - k) // 2 + 1
    Wo = (W + 2 * pad - k) // 2 + 1
    qmin = (0 - pad) // 2
    qmax = (k - 1 - pad) // 2
    spread = qmax - qmin
    Wpc = Wo + spread
    Hop = Ho + spread + (1 if spread > 0 else 0)
    lo = -2 * qmin
    hi_r = max(0, 2 * Hop - lo - H)
    hi_c = max(0, 2 * Wpc - lo - W)
    xp = jnp.pad(x_real, ((0, 0), (lo, hi_r), (lo, hi_c), (0, 0))).astype(jnp.bfloat16)
    tap_geo = []
    for di in range(k):
        for dj in range(k):
            qi, ri = (di - pad) // 2, (di - pad) % 2
            qj, rj = (dj - pad) // 2, (dj - pad) % 2
            tap_geo.append((ri * 2 + rj, (qi - qmin) * Wpc + (qj - qmin), di * k + dj))
    used = sorted({g[0] for g in tap_geo})
    remap = {ph: i for i, ph in enumerate(used)}
    taps = tuple((remap[ph], off, t) for ph, off, t in tap_geo)
    phases = []
    for ph in used:
        ri, rj = ph // 2, ph % 2
        sl = xp[:, ri:ri + 2 * Hop:2, rj:rj + 2 * Wpc:2, :][:, :Hop, :Wpc, :]
        phases.append(sl)
    x_ph = jnp.stack(phases, axis=1).reshape(N, len(used), Hop * Wpc, Cin)
    w_flat = w.reshape(k * k, Cin, Cout).astype(jnp.bfloat16)
    mask = _stats_col_mask(Ho, Wpc, 0, Wo)
    out, stats = _conv_taps(x_ph, w_flat, b, taps, Ho, Wpc, Cout, mask)
    return out.reshape(N, Ho, Wpc, Cout), stats, Ho, Wo


def _bn_scale_shift(stats, count, gamma, beta):
    """Training-mode BatchNorm folded to y = x*scale + shift (biased variance)."""
    # TODO(synk): E[x^2]-E[x]^2 in f32 can cancel for near-constant channels;
    # a shifted/Welford reduction would be more robust for very deep nets.
    mean = stats[0] / count
    var = stats[1] / count - mean * mean
    inv = gamma * lax.rsqrt(var + _EPS)
    return inv.reshape(1, -1), (beta - mean * inv).reshape(1, -1)


def bn_affine_relu(x4, Ho, Wo, c0, scale, shift):
    """BN-affine + ReLU; output is the bf16 stored layout (N, Ho+4, Wo+2, C)."""
    N, _, Wpitch, C = x4.shape
    return pl.pallas_call(
        functools.partial(_affine_relu_kernel, Ho=Ho, Wo=Wo, c0=c0),
        out_shape=jax.ShapeDtypeStruct((N, Ho + 4, Wo + 2, C), jnp.bfloat16),
        grid_spec=pltpu.PrefetchScalarGridSpec(
            num_scalar_prefetch=0, grid=(N,),
            in_specs=[pl.BlockSpec((1, Ho, Wpitch, C), lambda n: (n, 0, 0, 0)),
                      pl.BlockSpec((1, C), lambda n: (0, 0)),
                      pl.BlockSpec((1, C), lambda n: (0, 0))],
            out_specs=pl.BlockSpec((1, Ho + 4, Wo + 2, C), lambda n: (n, 0, 0, 0))),
        compiler_params=_cp(("parallel",)),
    )(x4, scale, shift)


def bn_add_relu(h4, Ho, Wo, ch0, scale2, shift2, sc4, rs0, cs0, scale_s, shift_s):
    """BN2-affine + ReLU + residual add (+ shortcut BN affine) + ReLU, fused;
    output is the bf16 stored layout."""
    N, _, Wph, C = h4.shape
    Hs, Ws = sc4.shape[1], sc4.shape[2]
    return pl.pallas_call(
        functools.partial(_bn_add_relu_kernel, Ho=Ho, Wo=Wo, ch0=ch0, rs0=rs0, cs0=cs0),
        out_shape=jax.ShapeDtypeStruct((N, Ho + 4, Wo + 2, C), jnp.bfloat16),
        grid_spec=pltpu.PrefetchScalarGridSpec(
            num_scalar_prefetch=0, grid=(N,),
            in_specs=[pl.BlockSpec((1, Ho, Wph, C), lambda n: (n, 0, 0, 0)),
                      pl.BlockSpec((1, C), lambda n: (0, 0)),
                      pl.BlockSpec((1, C), lambda n: (0, 0)),
                      pl.BlockSpec((1, Hs, Ws, C), lambda n: (n, 0, 0, 0)),
                      pl.BlockSpec((1, C), lambda n: (0, 0)),
                      pl.BlockSpec((1, C), lambda n: (0, 0))],
            out_specs=pl.BlockSpec((1, Ho + 4, Wo + 2, C), lambda n: (n, 0, 0, 0))),
        compiler_params=_cp(("parallel",)),
    )(h4, scale2, shift2, sc4, scale_s, shift_s)


def max_pool_3x3_s2(x):
    """nn.MaxPool2d(3, stride=2, padding=1) with fused per-channel BN stats."""
    N, H1, W1, C = x.shape
    H2 = (H1 + 2 - 3) // 2 + 1
    W2 = (W1 + 2 - 3) // 2 + 1
    xp = jnp.pad(x, ((0, 0), (1, 1), (1, 1), (0, 0)), constant_values=-jnp.inf)
    phases = []
    for a in range(2):
        for bcol in range(2):
            ph = xp[:, a::2, bcol::2, :][:, :H2 + 1, :W2 + 1, :]
            phases.append(jnp.pad(
                ph,
                ((0, 0), (0, H2 + 1 - ph.shape[1]), (0, W2 + 1 - ph.shape[2]), (0, 0)),
                constant_values=-jnp.inf))
    pooled, st = pl.pallas_call(
        functools.partial(_maxpool_kernel, H2=H2, W2=W2),
        out_shape=(jax.ShapeDtypeStruct((N, H2, W2, C), jnp.bfloat16),
                   jax.ShapeDtypeStruct((N, 2, C), jnp.float32)),
        grid_spec=pltpu.PrefetchScalarGridSpec(
            num_scalar_prefetch=0, grid=(N,),
            in_specs=[pl.BlockSpec((1, H2 + 1, W2 + 1, C), lambda n: (n, 0, 0, 0))] * 4,
            out_specs=[pl.BlockSpec((1, H2, W2, C), lambda n: (n, 0, 0, 0)),
                       pl.BlockSpec((1, 2, C), lambda n: (n, 0, 0))]),
        compiler_params=_cp(("parallel",)),
    )(*phases)
    return pooled, jnp.sum(st, axis=0)


# ---------------------------------------------------------------------------
# Parameter initialization (deterministic, synthetic)
# ---------------------------------------------------------------------------
class KeyGen:
    def __init__(self, key):
        self._key = key

    def __call__(self):
        self._key, sub = jax.random.split(self._key)
        return sub


def _conv_init(kg, kh, kw, cin, cout):
    std = (2.0 / (kh * kw * cin)) ** 0.5
    w = std * jax.random.normal(kg(), (kh, kw, cin, cout), jnp.float32)
    b = 0.01 * jax.random.normal(kg(), (cout,), jnp.float32)
    return w, b


def _bn_init(kg, c):
    gamma = 1.0 + 0.1 * jax.random.normal(kg(), (c,), jnp.float32)
    beta = 0.1 * jax.random.normal(kg(), (c,), jnp.float32)
    return gamma, beta


def _resblock_init(kg, cin, cout, downsample):
    p = {}
    p["w1"], p["b1"] = _conv_init(kg, 3, 3, cin, cout)
    p["g1"], p["be1"] = _bn_init(kg, cout)
    p["w2"], p["b2"] = _conv_init(kg, 3, 3, cout, cout)
    p["g2"], p["be2"] = _bn_init(kg, cout)
    if downsample:                       # presence of "ws" marks a downsample block
        p["ws"], p["bs"] = _conv_init(kg, 1, 1, cin, cout)
        p["gs"], p["bes"] = _bn_init(kg, cout)
    return p


def make_resnet_params(kg, in_channels, repeat, outputs):
    filters = [64, 64, 128, 256, 512]            # useBottleneck=False
    p = {}
    p["w0"], p["b0"] = _conv_init(kg, 7, 7, in_channels, 64)
    p["g0"], p["be0"] = _bn_init(kg, 64)
    layer_cfg = [
        (filters[0], filters[1], repeat[0], False),
        (filters[1], filters[2], repeat[1], True),
        (filters[2], filters[3], repeat[2], True),
        (filters[3], filters[4], repeat[3], True),
    ]
    layers = []
    for cin, cout, rep, ds in layer_cfg:
        blocks = [_resblock_init(kg, cin, cout, ds)]
        for _ in range(1, rep):
            blocks.append(_resblock_init(kg, cout, cout, False))
        layers.append(blocks)
    p["layers"] = layers
    kfc = (1.0 / filters[4]) ** 0.5
    p["wfc"] = jax.random.uniform(kg(), (filters[4], outputs), jnp.float32, -kfc, kfc)
    p["bfc"] = jax.random.uniform(kg(), (outputs,), jnp.float32, -kfc, kfc)
    return p


# ---------------------------------------------------------------------------
# Forward pass
# ---------------------------------------------------------------------------
def stem_forward(x_nhwc, params):
    # layer0 (module order): Conv7x7/s2/p3 -> MaxPool3x3/s2/p1 -> BN -> ReLU
    h = conv2d_im2col(x_nhwc, params["w0"], params["b0"], stride=2, pad=3)
    pooled, st = max_pool_3x3_s2(h)                 # bf16 pooled + fused BN stats
    N, H2, W2, C = pooled.shape
    scale, shift = _bn_scale_shift(st, N * H2 * W2, params["g0"], params["be0"])
    return bn_affine_relu(pooled, H2, W2, 0, scale, shift)


def resblock_forward(x_st, p):
    # Block semantics (matches the in-file reference used throughout):
    #   h = ReLU(BN(conv1(x))); h = ReLU(BN(conv2(h))); out = ReLU(h + shortcut)
    N, Hp4, Wp, Cin = x_st.shape
    H, W = Hp4 - 4, Wp - 2
    if "ws" in p:                                            # downsample block
        x_real = x_st[:, 2:2 + H, 1:1 + W, :]
        h1, st1, Ho, Wo = conv_s2(x_real, p["w1"], p["b1"], pad=1)
        cnt = N * Ho * Wo
        s1, sh1 = _bn_scale_shift(st1, cnt, p["g1"], p["be1"])
        h1_st = bn_affine_relu(h1, Ho, Wo, 0, s1, sh1)
        sc, sts, _, _ = conv_s2(x_real, p["ws"], p["bs"], pad=0)   # 1x1/s2 shortcut
        ss, bs = _bn_scale_shift(sts, cnt, p["gs"], p["bes"])
        sc4, rs0, cs0 = sc, 0, 0
    else:                                                    # identity block
        Ho, Wo = H, W
        h1, st1 = conv3x3_s1_stored(x_st, p["w1"], p["b1"])
        cnt = N * Ho * Wo
        s1, sh1 = _bn_scale_shift(st1, cnt, p["g1"], p["be1"])
        h1_st = bn_affine_relu(h1, Ho, Wo, 1, s1, sh1)
        sc4, rs0, cs0 = x_st, 2, 1                           # read shortcut in place
        ss = jnp.ones((1, Cin), jnp.float32)
        bs = jnp.zeros((1, Cin), jnp.float32)
    h2, st2 = conv3x3_s1_stored(h1_st, p["w2"], p["b2"])
    s2_, sh2 = _bn_scale_shift(st2, cnt, p["g2"], p["be2"])
    return bn_add_relu(h2, Ho, Wo, 1, s2_, sh2, sc4, rs0, cs0, ss, bs)


def resnet_forward(x_nchw, params):
    x = jnp.transpose(x_nchw, (0, 2, 3, 1)).astype(jnp.float32)
    x_st = stem_forward(x, params)
    for layer in params["layers"]:
        for bp in layer:
            x_st = resblock_forward(x_st, bp)
    N, Hp4, Wpf, Cf = x_st.shape
    # AdaptiveAvgPool2d(1) + flatten (trivial glue; halo rows / pad cols are zero)
    feat = jnp.sum(x_st.astype(jnp.float32), axis=(1, 2)) / float((Hp4 - 4) * (Wpf - 2))
    return matmul_bias(feat, params["wfc"], params["bfc"])


def pallas_features(x_nchw, params, num_layers):
    x = jnp.transpose(x_nchw, (0, 2, 3, 1)).astype(jnp.float32)
    x_st = stem_forward(x, params)
    for layer in params["layers"][:num_layers]:
        for bp in layer:
            x_st = resblock_forward(x_st, bp)
    return x_st[:, 2:-2, 1:-1, :].astype(jnp.float32)


# ---------------------------------------------------------------------------
# Plain-JAX f32 reference (correctness spot-check only)
# ---------------------------------------------------------------------------
def _ref_conv(x, w, b, stride, pad):
    y = lax.conv_general_dilated(x, w, (stride, stride),
                                 ((pad, pad), (pad, pad)),
                                 dimension_numbers=("NHWC", "HWIO", "NHWC"))
    return y + b


def _ref_bn(x, gamma, beta):
    mean = jnp.mean(x, axis=(0, 1, 2))
    var = jnp.mean(jnp.square(x), axis=(0, 1, 2)) - mean * mean
    return (x - mean) * (gamma * lax.rsqrt(var + _EPS)) + beta


def _ref_block(x, p):
    if "ws" in p:
        sc = _ref_bn(_ref_conv(x, p["ws"], p["bs"], 2, 0), p["gs"], p["bes"])
        s1 = 2
    else:
        sc = x
        s1 = 1
    h = jax.nn.relu(_ref_bn(_ref_conv(x, p["w1"], p["b1"], s1, 1), p["g1"], p["be1"]))
    h = jax.nn.relu(_ref_bn(_ref_conv(h, p["w2"], p["b2"], 1, 1), p["g2"], p["be2"]))
    return jax.nn.relu(h + sc)


def ref_features(x_nchw, params, num_layers):
    x = jnp.transpose(x_nchw, (0, 2, 3, 1)).astype(jnp.float32)
    x = _ref_conv(x, params["w0"], params["b0"], 2, 3)
    x = lax.reduce_window(x, -jnp.inf, lax.max, (1, 3, 3, 1), (1, 2, 2, 1),
                          ((0, 0), (1, 1), (1, 1), (0, 0)))
    x = jax.nn.relu(_ref_bn(x, params["g0"], params["be0"]))
    for layer in params["layers"][:num_layers]:
        for bp in layer:
            x = _ref_block(x, bp)
    return x


# ---------------------------------------------------------------------------
if __name__ == "__main__":
    key_in, key_params = jax.random.split(jax.random.PRNGKey(0))
    # small, forward-consistent shapes: batch=2, in_channels=3, spatial=32
    x = jax.random.normal(key_in, (2, 3, 32, 32), jnp.float32)
    params = make_resnet_params(KeyGen(key_params), in_channels=3,
                                repeat=(1, 1, 1, 1), outputs=10)

    # Spot-check all kernel variants against a plain-JAX f32 reference on the
    # stem + layer1 + layer2 prefix (loose tolerance: bf16 GEMMs / bf16 stored
    # activations).
    got = pallas_features(x, params, num_layers=2)
    want = ref_features(x, params, num_layers=2)
    err = float(jnp.max(jnp.abs(got - want)))
    mag = float(jnp.max(jnp.abs(want)))
    assert err <= 0.15 * mag + 0.1, f"kernel mismatch: max|err|={err}, max|ref|={mag}"

    fwd = jax.jit(resnet_forward)
    out = jax.block_until_ready(fwd(x, params))
    assert out.shape == (2, 10), out.shape
    assert bool(jnp.all(jnp.isfinite(out)))
    print("KERNEL_OK")
</pallas_src>

<mosaic_0001>
module attributes {stable_mosaic.version = 11 : i64} {
  func.func @_matmul_bias_kernel(%arg0: i32, %arg1: i32, %arg2: i32, %arg3: memref<256x256xbf16, #tpu.memory_space<vmem>>, %arg4: memref<256x128xbf16, #tpu.memory_space<vmem>>, %arg5: memref<1x128xf32, #tpu.memory_space<vmem>>, %arg6: memref<256x128xf32, #tpu.memory_space<vmem>>, %arg7: memref<256x128xf32, #tpu.memory_space<vmem>>) attributes {dimension_semantics = [#tpu.dimension_semantics<parallel>, #tpu.dimension_semantics<parallel>, #tpu.dimension_semantics<arbitrary>], iteration_bounds = array<i64: 2, 1, 1>, scalar_prefetch = 0 : i64, scratch_operands = 1 : i64, tpu.core_type = #tpu.core_type<tc>, window_params = [{transform_indices = @transform_0, window_bounds = array<i64: 256, 256>}, {transform_indices = @transform_1, window_bounds = array<i64: 256, 128>}, {transform_indices = @transform_2, window_bounds = array<i64: 1, 128>}, {transform_indices = @transform_3, window_bounds = array<i64: 256, 128>}]} {
    %c0_i32 = arith.constant 0 : i32
    %0 = arith.cmpi eq, %arg2, %c0_i32 : i32
    %1 = arith.extui %0 : i1 to i32
    %c0_i32_0 = arith.constant 0 : i32
    %2 = arith.cmpi ne, %1, %c0_i32_0 : i32
    scf.if %2 {
      %c0_10 = arith.constant 0 : index
      %c0_11 = arith.constant 0 : index
      %12 = vector.load %arg5[%c0_10, %c0_11] : memref<1x128xf32, #tpu.memory_space<vmem>>, vector<1x128xf32>
      %13 = vector.shape_cast %12 : vector<1x128xf32> to vector<1x128xf32>
      %14 = vector.broadcast %13 : vector<1x128xf32> to vector<256x128xf32>
      %c0_12 = arith.constant 0 : index
      %c0_13 = arith.constant 0 : index
      %15 = vector.load %arg7[%c0_12, %c0_13] : memref<256x128xf32, #tpu.memory_space<vmem>>, vector<256x128xf32>
      tpu.vector_store %arg7[%c0_12, %c0_13], %14 {strides = array<i32>} : memref<256x128xf32, #tpu.memory_space<vmem>>, vector<256x128xf32>,
    } else {
    }
    %c0 = arith.constant 0 : index
    %c0_1 = arith.constant 0 : index
    %3 = vector.load %arg7[%c0, %c0_1] : memref<256x128xf32, #tpu.memory_space<vmem>>, vector<256x128xf32>
    %c0_2 = arith.constant 0 : index
    %c0_3 = arith.constant 0 : index
    %4 = vector.load %arg3[%c0_2, %c0_3] : memref<256x256xbf16, #tpu.memory_space<vmem>>, vector<256x256xbf16>
    %c0_4 = arith.constant 0 : index
    %c0_5 = arith.constant 0 : index
    %5 = vector.load %arg4[%c0_4, %c0_5] : memref<256x128xbf16, #tpu.memory_space<vmem>>, vector<256x128xbf16>
    %cst = arith.constant dense<0.000000e+00> : vector<256x128xf32>
    %6 = tpu.matmul %4, %5, %cst {dimension_numbers = #tpu.dot_dimension_numbers<[1], [0], [0], [1], [0, 0, 1, 1], [], []>} : vector<256x256xbf16>, vector<256x128xbf16>, vector<256x128xf32> -> vector<256x128xf32>
    %7 = arith.addf %3, %6 : vector<256x128xf32>
    %c0_6 = arith.constant 0 : index
    %c0_7 = arith.constant 0 : index
    %8 = vector.load %arg7[%c0_6, %c0_7] : memref<256x128xf32, #tpu.memory_space<vmem>>, vector<256x128xf32>
    tpu.vector_store %arg7[%c0_6, %c0_7], %7 {strides = array<i32>} : memref<256x128xf32, #tpu.memory_space<vmem>>, vector<256x128xf32>,
    %c0_i32_8 = arith.constant 0 : i32
    %9 = arith.cmpi eq, %arg2, %c0_i32_8 : i32
    %10 = arith.extui %9 : i1 to i32
    %c0_i32_9 = arith.constant 0 : i32
    %11 = arith.cmpi ne, %10, %c0_i32_9 : i32
    scf.if %11 {
      %c0_10 = arith.constant 0 : index
      %c0_11 = arith.constant 0 : index
      %12 = vector.load %arg7[%c0_10, %c0_11] : memref<256x128xf32, #tpu.memory_space<vmem>>, vector<256x128xf32>
      %c0_12 = arith.constant 0 : index
      %c0_13 = arith.constant 0 : index
      %13 = vector.load %arg6[%c0_12, %c0_13] : memref<256x128xf32, #tpu.memory_space<vmem>>, vector<256x128xf32>
      tpu.vector_store %arg6[%c0_12, %c0_13], %12 {strides = array<i32>} : memref<256x128xf32, #tpu.memory_space<vmem>>, vector<256x128xf32>,
    } else {
    }
    return
  }
  func.func @transform_0(%arg0: i32, %arg1: i32, %arg2: i32) -> (i32, i32) {
    %c0_i32 = arith.constant 0 : i32
    return %arg0, %arg2 : i32, i32
  }
  func.func @transform_1(%arg0: i32, %arg1: i32, %arg2: i32) -> (i32, i32) {
    %c0_i32 = arith.constant 0 : i32
    return %arg2, %arg1 : i32, i32
  }
  func.func @transform_2(%arg0: i32, %arg1: i32, %arg2: i32) -> (i32, i32) {
    %c0_i32 = arith.constant 0 : i32
    %c0_i32_0 = arith.constant 0 : i32
    return %c0_i32, %arg1 : i32, i32
  }
  func.func @transform_3(%arg0: i32, %arg1: i32, %arg2: i32) -> (i32, i32) {
    %c0_i32 = arith.constant 0 : i32
    return %arg0, %arg1 : i32, i32
  }
}

</mosaic_0001>

<llo_original>
// kernel: tpu_custom_call.1
$region0: #{tpu_custom_call.1}
  #allocation0 [shape = 'u32[]', space=smem, size = 0x4, offset = 0x4, fixed_abs, tag = 'smem constant byte address 0x4 - core index']
  #allocation1 [shape = 'u32[144,128]{1,0:T(1,128)}', space=vmem, size = 0x12000, scoped, tag = 'internal scratch']
  #allocation2 [shape = 'f32[256,128]{1,0:T(8,128)}', space=vmem, size = 0x20000, scoped, tag = 'scratch operand']
  %s0 = inlined_call_operand.hbm [shape: bf16[512,256], index: 0, kind: input, shape index: {}]
  %s1 = inlined_call_operand.hbm [shape: bf16[256,128], index: 1, kind: input, shape index: {}]
  %s2 = inlined_call_operand.vmem [shape: f32[1,128], index: 2, kind: input, shape index: {}]
  %s3 = inlined_call_operand.hbm [shape: f32[512,128], index: 3, kind: output, shape index: {}]
  %s4 = sld [smem:[#allocation0]]
  $region61: #{tpu_custom_call.1} parent=0
    _
  %s6 = ssub.s32 1, %s4
  %s7 = scalar_select 0, %s6, %s4
  $region1: #{tpu_custom_call.1} parent=0
    #allocation3 [shape = 'u8[262144]{0}', space=vmem, size = 0x40000, scoped, tag = 'input window, operand 0']
    #allocation4 [shape = 's32[2]{0}', space=sflag, size = 0x8, scoped, tag = 'scoped memory for tpu_custom_call.1']
    #allocation5 [shape = 's32[2]{0}', space=sflag, size = 0x8, scoped, tag = 'scoped memory for tpu_custom_call.1']
    #allocation6 [shape = 'u8[65536]{0}', space=vmem, size = 0x10000, scoped, tag = 'input window, operand 1, single buffered']
    #allocation7 [shape = 's32[1]{0}', space=sflag, size = 0x4, scoped, tag = 'scoped memory for tpu_custom_call.1']
    #allocation8 [shape = 'u8[262144]{0}', space=vmem, size = 0x40000, scoped, tag = 'output window, operand 0']
    %8 = vsyncpa [#allocation4], 0
    %s9 = scalar_lea.sflag [#allocation4], 1
    %10 = vsyncpa %s9, 0
    %11 = vsyncpa [#allocation7], 0
    %12 = vsyncpa [#allocation5], 0
    %s13 = scalar_lea.sflag [#allocation5], 1
    %14 = vsyncpa %s13, 0
    loop: start=0, step=1, limit=4
    $region2: #{tpu_custom_call.1} parent=1 // loop_pre_header
      _
    $region3: #{tpu_custom_call.1} parent=1 // loop_header
      %s16 = sphi 0, %s20
      %p17 = scmp.ge.s32.totalorder %s16, 4
      %s23 = sphi 0, %s42
      %s24 = sphi 0, %s38
      %s25 = sphi 0, %s34
      %s26 = sphi 0, %s23
      %s27 = sphi 0, %s24
      %s28 = sphi 0, %s25
      %s29 = sphi 0, %s26
      %s30 = sphi 0, %s27
      %s31 = sphi 0, %s28
      %s47 = sphi 0, %s49
      %s50 = sphi 0, %s47
      %s51 = sphi 0, %s50
      %s67 = sphi 0, %s51
      %s75 = sphi 0, %s77
      %s78 = sphi 0, %s75
      %s79 = sphi 0, %s78
      %s95 = sphi 0, %s79
      %s101 = sphi 0, %s103
      %s104 = sphi 0, %s101
      %s105 = sphi 0, %s104
      %s121 = sphi 0, %s105
      %s129 = sphi 0, %s131
      %s132 = sphi 0, %s129
      %s133 = sphi 0, %s132
      %s149 = sphi 0, %s133
    $region4: #{tpu_custom_call.1} parent=1 // loop_header_branch
      %19 = sbr.rel (%p17) target = $region8
    $region5: #{tpu_custom_call.1} parent=1 // loop_body
      %s21 = ssub.s32 %s16, 1
      %s22 = ssub.s32 %s16, 2
      %s32 = sadd.s32 1, %s25
      %p33 = scmp.ge.s32.totalorder %s32, 1
      %s34 = scalar_select %p33, 0, %s32
      %s35 = sadd.s32 1, %s24
      %s36 = scalar_select %p33, %s35, %s24
      %p37 = scmp.ge.s32.totalorder %s36, 1
      %s38 = scalar_select %p37, 0, %s36
      %s39 = sadd.s32 1, %s23
      %s40 = scalar_select %p37, %s39, %s23
      %p41 = scmp.ge.s32.totalorder %s40, 2
      %s42 = scalar_select %p41, 0, %s40
      %s43 = ssub.s32 %s23, %s42
      %s44 = ssub.s32 %s25, %s34
      %s45 = sor.u32 %s43, %s44
      %p46 = scmp.eq.s32.totalorder %s45, 0
      %s48 = sadd.s32 %s47, 1
      %s49 = scalar_select %p46, %s47, %s48
      %p52 = pneg %p46
      %p53 = scmp.eq.s32.totalorder %s16, 1
      %p54 = por %p52, %p53
      %p55 = scmp.ne.s32.totalorder %s47, %s50
      %p56 = scmp.eq.s32.totalorder %s16, 0
      %p57 = por %p55, %p56
      %p58 = scmp.ne.s32.totalorder %s47, %s50
      %p59 = scmp.eq.s32.totalorder %s21, 1
      %p60 = por %p58, %p59
      %p61 = scmp.ne.s32.totalorder %s50, %s51
      %p62 = scmp.eq.s32.totalorder %s21, 0
      %p63 = por %p61, %p62
      %p64 = scmp.ne.s32.totalorder %s50, %s51
      %p65 = scmp.eq.s32.totalorder %s22, 1
      %p66 = por %p64, %p65
      %p68 = scmp.ne.s32.totalorder %s51, %s67
      %p69 = scmp.eq.s32.totalorder %s22, 0
      %p70 = por %p68, %p69
      %s71 = ssub.s32 %s25, %s34
      %s72 = ssub.s32 %s24, %s38
      %s73 = sor.u32 %s71, %s72
      %p74 = scmp.eq.s32.totalorder %s73, 0
      %s76 = sadd.s32 %s75, 1
      %s77 = scalar_select %p74, %s75, %s76
      %p80 = pneg %p74
      %p81 = scmp.eq.s32.totalorder %s16, 1
      %p82 = por %p80, %p81
      %p83 = scmp.ne.s32.totalorder %s75, %s78
      %p84 = scmp.eq.s32.totalorder %s16, 0
      %p85 = por %p83, %p84
      %p86 = scmp.ne.s32.totalorder %s75, %s78
      %p87 = scmp.eq.s32.totalorder %s21, 1
      %p88 = por %p86, %p87
      %p89 = scmp.ne.s32.totalorder %s78, %s79
      %p90 = scmp.eq.s32.totalorder %s21, 0
      %p91 = por %p89, %p90
      %p92 = scmp.ne.s32.totalorder %s78, %s79
      %p93 = scmp.eq.s32.totalorder %s22, 1
      %p94 = por %p92, %p93
      %p96 = scmp.ne.s32.totalorder %s79, %s95
      %p97 = scmp.eq.s32.totalorder %s22, 0
      %p98 = por %p96, %p97
      %s99 = ssub.s32 %s24, %s38
      %p100 = scmp.eq.s32.totalorder %s99, 0
      %s102 = sadd.s32 %s101, 1
      %s103 = scalar_select %p100, %s101, %s102
      %p106 = pneg %p100
      %p107 = scmp.eq.s32.totalorder %s16, 1
      %p108 = por %p106, %p107
      %p109 = scmp.ne.s32.totalorder %s101, %s104
      %p110 = scmp.eq.s32.totalorder %s16, 0
      %p111 = por %p109, %p110
      %p112 = scmp.ne.s32.totalorder %s101, %s104
      %p113 = scmp.eq.s32.totalorder %s21, 1
      %p114 = por %p112, %p113
      %p115 = scmp.ne.s32.totalorder %s104, %s105
      %p116 = scmp.eq.s32.totalorder %s21, 0
      %p117 = por %p115, %p116
      %p118 = scmp.ne.s32.totalorder %s104, %s105
      %p119 = scmp.eq.s32.totalorder %s22, 1
      %p120 = por %p118, %p119
      %p122 = scmp.ne.s32.totalorder %s105, %s121
      %p123 = scmp.eq.s32.totalorder %s22, 0
      %p124 = por %p122, %p123
      %s125 = ssub.s32 %s23, %s42
      %s126 = ssub.s32 %s24, %s38
      %s127 = sor.u32 %s125, %s126
      %p128 = scmp.eq.s32.totalorder %s127, 0
      %s130 = sadd.s32 %s129, 1
      %s131 = scalar_select %p128, %s129, %s130
      %p134 = pneg %p128
      %p135 = scmp.eq.s32.totalorder %s16, 1
      %p136 = por %p134, %p135
      %p137 = scmp.ne.s32.totalorder %s129, %s132
      %p138 = scmp.eq.s32.totalorder %s16, 0
      %p139 = por %p137, %p138
      %p140 = scmp.ne.s32.totalorder %s129, %s132
      %p141 = scmp.eq.s32.totalorder %s21, 1
      %p142 = por %p140, %p141
      %p143 = scmp.ne.s32.totalorder %s132, %s133
      %p144 = scmp.eq.s32.totalorder %s21, 0
      %p145 = por %p143, %p144
      %p146 = scmp.ne.s32.totalorder %s132, %s133
      %p147 = scmp.eq.s32.totalorder %s22, 1
      %p148 = por %p146, %p147
      %p150 = scmp.ne.s32.totalorder %s133, %s149
      %p151 = scmp.eq.s32.totalorder %s22, 0
      %p152 = por %p150, %p151
      %p153 = scmp.le.s32.totalorder 1, %s16
      %p154 = scmp.lt.s32.totalorder %s16, 3
      %p155 = pnand %p153, %p154
      %p156 = pneg %p155
      // Predicated region
      $region9: #{tpu_custom_call.1} parent=5 // pred_check
        _
      $region10: #{tpu_custom_call.1} parent=5 // pred_check_branch
        %158 = sbr.rel (%p155) target = $region12
      $region11: #{tpu_custom_call.1} parent=5 // pred_region
        %s159 = ssub.s32 %s16, 1
        // Predicated region
        $region13: #{tpu_custom_call.1} parent=11 // pred_check
          %p160 = pneg %p91
        $region14: #{tpu_custom_call.1} parent=11 // pred_check_branch
          %162 = sbr.rel (%p160) target = $region16
        $region15: #{tpu_custom_call.1} parent=11 // pred_region
          %s163 = smul.u32 32, %s28
          %s165 = ssub.s32 2048, 2048
          %166 = vsyncadd [#allocation7], %s165
          %s167 = sadd.s32 %s27, %s163
          %s168 = smul.addr %s167, 64
          %s169 = scalar_lea.hbm %s1, %s168
          %s170 = sshll.u32 [#allocation6], 4
          %s171 = int_to_ptr.vmem [resolvable:$true] %s170
          %176 = dma.hbm_to_vmem [thread:$0]  %s169, 2048, %s171, [#allocation7], 64, 64, 4
        $region16: #{tpu_custom_call.1} parent=11 // pred_fallthru
          _
        // Predicated region
        $region17: #{tpu_custom_call.1} parent=11 // pred_check
          %p177 = pneg %p117
        $region18: #{tpu_custom_call.1} parent=11 // pred_check_branch
          %179 = sbr.rel (%p177) target = $region20
        $region19: #{tpu_custom_call.1} parent=11 // pred_region
          %p180 = scmp.lt.s32.totalorder %s27, 0
          %s181 = scalar_select %p180, %s27, 0
          %s182 = scalar_lea.vmem %s2, %s181
        $region20: #{tpu_custom_call.1} parent=11 // pred_fallthru
          _
      $region12: #{tpu_custom_call.1} parent=5 // pred_fallthru
        _
      %p183 = scmp.lt.s32.totalorder %s16, 2
      // Predicated region
      $region21: #{tpu_custom_call.1} parent=5 // pred_check
        %p184 = pneg %p183
      $region22: #{tpu_custom_call.1} parent=5 // pred_check_branch
        %186 = sbr.rel (%p184) target = $region24
      $region23: #{tpu_custom_call.1} parent=5 // pred_region
        // Predicated region
        $region25: #{tpu_custom_call.1} parent=23 // pred_check
          %p187 = pneg %p57
        $region26: #{tpu_custom_call.1} parent=23 // pred_check_branch
          %189 = sbr.rel (%p187) target = $region28
        $region27: #{tpu_custom_call.1} parent=23 // pred_region
          %s190 = sand.u32 %s47, 1
          %s191 = scalar_lea.sflag [#allocation4], %s190
          %s192 = sand.u32 %s47, 1
          %s193 = smul.addr %s192, 256
          %s194 = scalar_lea.vmem [#allocation3], %s193
          %s195 = smul.u32 32, %s23
          %s196 = smul.u32 2, %s25
          %s198 = ssub.s32 4096, 4096
          %199 = vsyncadd %s191, %s198
          %s200 = smul.addr %s195, 2
          %s201 = sadd.s32 %s196, %s200
          %s202 = smul.addr %s201, 64
          %s203 = scalar_lea.hbm %s0, %s202
          %s204 = sshll.u32 %s194, 4
          %s205 = int_to_ptr.vmem [resolvable:$true] %s204
          %210 = dma.hbm_to_vmem [thread:$0]  %s203, 4096, %s205, %s191, 128, 128, 8
        $region28: #{tpu_custom_call.1} parent=23 // pred_fallthru
          _
      $region24: #{tpu_custom_call.1} parent=5 // pred_fallthru
        _
      %p211 = scmp.le.s32.totalorder 1, %s16
      %p212 = scmp.lt.s32.totalorder %s16, 3
      %p213 = pnand %p211, %p212
      %p214 = pneg %p213
      // Predicated region
      $region29: #{tpu_custom_call.1} parent=5 // pred_check
        _
      $region30: #{tpu_custom_call.1} parent=5 // pred_check_branch
        %216 = sbr.rel (%p213) target = $region32
      $region31: #{tpu_custom_call.1} parent=5 // pred_region
        %s217 = ssub.s32 %s16, 1
        %s218 = sand.u32 %s50, 1
        %s219 = scalar_lea.sflag [#allocation4], %s218
        %s220 = sand.u32 %s50, 1
        %s221 = smul.addr %s220, 256
        %s222 = scalar_lea.vmem [#allocation3], %s221
        // Predicated region
        $region33: #{tpu_custom_call.1} parent=31 // pred_check
          %p223 = pneg %p63
        $region34: #{tpu_custom_call.1} parent=31 // pred_check_branch
          %225 = sbr.rel (%p223) target = $region36
        $region35: #{tpu_custom_call.1} parent=31 // pred_region
          %226 = dma.done %s219, 4096
        $region36: #{tpu_custom_call.1} parent=31 // pred_fallthru
          _
        // Predicated region
        $region37: #{tpu_custom_call.1} parent=31 // pred_check
          %p227 = pneg %p91
        $region38: #{tpu_custom_call.1} parent=31 // pred_check_branch
          %229 = sbr.rel (%p227) target = $region40
        $region39: #{tpu_custom_call.1} parent=31 // pred_region
          %230 = dma.done [#allocation7], 2048
        $region40: #{tpu_custom_call.1} parent=31 // pred_fallthru
          _
        %s231 = sand.u32 %s50, 1
        %s232 = scalar_lea.sflag [#allocation4], %s231
        %s233 = sand.u32 %s50, 1
        %s234 = smul.addr %s233, 256
        %s235 = scalar_lea.vmem [#allocation3], %s234
        %p236 = pneg %p63
        %p237 = pneg %p60
        %p238 = pneg %p91
        %p239 = pneg %p88
        %p240 = scmp.lt.s32.totalorder %s27, 0
        %s241 = scalar_select %p240, %s27, 0
        %s242 = scalar_lea.vmem %s2, %s241
        %p243 = pneg %p117
        %p244 = pneg %p114
        %p245 = pneg %p145
        %p246 = pneg %p142
        %s247 = sand.u32 %s132, 1
        %s248 = scalar_lea.sflag [#allocation5], %s247
        %s249 = sand.u32 %s132, 1
        %s250 = smul.addr %s249, 256
        %s251 = scalar_lea.vmem [#allocation8], %s250
        %s252 = smul.u32 32, %s26
        %s253 = smul.u32 2, %s28
        %s254 = smul.u32 32, %s28
        %p255 = scmp.lt.s32.totalorder %s27, 0
        %s256 = scalar_select %p255, %s27, 0
        %s257 = scalar_lea.vmem %s2, %s256
        %s258 = smul.u32 32, %s26
        %p260 = scmp.eq.s32.totalorder %s28, 0
        // Predicated region
        $region41: #{tpu_custom_call.1} parent=31 // pred_check
          %p261 = pneg %p260
        $region42: #{tpu_custom_call.1} parent=31 // pred_check_branch
          %263 = sbr.rel (%p261) target = $region44
        $region43: #{tpu_custom_call.1} parent=31 // pred_region
          %v264 = vld [vmem:[%s257] sm:$0x1]
          %v266 = vlaneseq
          %v267 = vshrl.u32 %v266, 7
          %v268 = vsub.s32 0, %v267
          %v269 = vrot.slane %v264, %v268
          %271 = vst [vmem:[#allocation2] sm:$0xff] %v269
          %272 = vst [vmem:[#allocation2 + $0x8] sm:$0xff] %v269
          %273 = vst [vmem:[#allocation2 + $0x10] sm:$0xff] %v269
          %274 = vst [vmem:[#allocation2 + $0x18] sm:$0xff] %v269
          %275 = vst [vmem:[#allocation2 + $0x20] sm:$0xff] %v269
          %276 = vst [vmem:[#allocation2 + $0x28] sm:$0xff] %v269
          %277 = vst [vmem:[#allocation2 + $0x30] sm:$0xff] %v269
          %278 = vst [vmem:[#allocation2 + $0x38] sm:$0xff] %v269
          %279 = vst [vmem:[#allocation2 + $0x40] sm:$0xff] %v269
          %280 = vst [vmem:[#allocation2 + $0x48] sm:$0xff] %v269
          %281 = vst [vmem:[#allocation2 + $0x50] sm:$0xff] %v269
          %282 = vst [vmem:[#allocation2 + $0x58] sm:$0xff] %v269
          %283 = vst [vmem:[#allocation2 + $0x60] sm:$0xff] %v269
          %284 = vst [vmem:[#allocation2 + $0x68] sm:$0xff] %v269
          %285 = vst [vmem:[#allocation2 + $0x70] sm:$0xff] %v269
          %286 = vst [vmem:[#allocation2 + $0x78] sm:$0xff] %v269
          %287 = vst [vmem:[#allocation2 + $0x80] sm:$0xff] %v269
          %288 = vst [vmem:[#allocation2 + $0x88] sm:$0xff] %v269
          %289 = vst [vmem:[#allocation2 + $0x90] sm:$0xff] %v269
          %290 = vst [vmem:[#allocation2 + $0x98] sm:$0xff] %v269
          %291 = vst [vmem:[#allocation2 + $0xa0] sm:$0xff] %v269
          %292 = vst [vmem:[#allocation2 + $0xa8] sm:$0xff] %v269
          %293 = vst [vmem:[#allocation2 + $0xb0] sm:$0xff] %v269
          %294 = vst [vmem:[#allocation2 + $0xb8] sm:$0xff] %v269
          %295 = vst [vmem:[#allocation2 + $0xc0] sm:$0xff] %v269
          %296 = vst [vmem:[#allocation2 + $0xc8] sm:$0xff] %v269
          %297 = vst [vmem:[#allocation2 + $0xd0] sm:$0xff] %v269
          %298 = vst [vmem:[#allocation2 + $0xd8] sm:$0xff] %v269
          %299 = vst [vmem:[#allocation2 + $0xe0] sm:$0xff] %v269
          %300 = vst [vmem:[#allocation2 + $0xe8] sm:$0xff] %v269
          %301 = vst [vmem:[#allocation2 + $0xf0] sm:$0xff] %v269
          %302 = vst [vmem:[#allocation2 + $0xf8] sm:$0xff] %v269
        $region44: #{tpu_custom_call.1} parent=31 // pred_fallthru
          _
        %v303 = vld [vmem:[#allocation2] sm:$0xff]
        %v304 = vld [vmem:[#allocation2 + $0x8] sm:$0xff]
        %v305 = vld [vmem:[#allocation2 + $0x10] sm:$0xff]
        %v306 = vld [vmem:[#allocation2 + $0x18] sm:$0xff]
        %v307 = vld [vmem:[#allocation2 + $0x20] sm:$0xff]
        %v308 = vld [vmem:[#allocation2 + $0x28] sm:$0xff]
        %v309 = vld [vmem:[#allocation2 + $0x30] sm:$0xff]
        %v310 = vld [vmem:[#allocation2 + $0x38] sm:$0xff]
        %v311 = vld [vmem:[#allocation2 + $0x40] sm:$0xff]
        %v312 = vld [vmem:[#allocation2 + $0x48] sm:$0xff]
        %v313 = vld [vmem:[#allocation2 + $0x50] sm:$0xff]
        %v314 = vld [vmem:[#allocation2 + $0x58] sm:$0xff]
        %v315 = vld [vmem:[#allocation2 + $0x60] sm:$0xff]
        %v316 = vld [vmem:[#allocation2 + $0x68] sm:$0xff]
        %v317 = vld [vmem:[#allocation2 + $0x70] sm:$0xff]
        %v318 = vld [vmem:[#allocation2 + $0x78] sm:$0xff]
        %v319 = vld [vmem:[#allocation2 + $0x80] sm:$0xff]
        %v320 = vld [vmem:[#allocation2 + $0x88] sm:$0xff]
        %v321 = vld [vmem:[#allocation2 + $0x90] sm:$0xff]
        %v322 = vld [vmem:[#allocation2 + $0x98] sm:$0xff]
        %v323 = vld [vmem:[#allocation2 + $0xa0] sm:$0xff]
        %v324 = vld [vmem:[#allocation2 + $0xa8] sm:$0xff]
        %v325 = vld [vmem:[#allocation2 + $0xb0] sm:$0xff]
        %v326 = vld [vmem:[#allocation2 + $0xb8] sm:$0xff]
        %v327 = vld [vmem:[#allocation2 + $0xc0] sm:$0xff]
        %v328 = vld [vmem:[#allocation2 + $0xc8] sm:$0xff]
        %v329 = vld [vmem:[#allocation2 + $0xd0] sm:$0xff]
        %v330 = vld [vmem:[#allocation2 + $0xd8] sm:$0xff]
        %v331 = vld [vmem:[#allocation2 + $0xe0] sm:$0xff]
        %v332 = vld [vmem:[#allocation2 + $0xe8] sm:$0xff]
        %v333 = vld [vmem:[#allocation2 + $0xf0] sm:$0xff]
        %v334 = vld [vmem:[#allocation2 + $0xf8] sm:$0xff]
        %v335 = vld [vmem:[%s222] sm:$0xff]
        %v336 = vld [vmem:[%s222 + $0x8] sm:$0xff]
        %v337 = vld [vmem:[%s222 + $0x10] sm:$0xff]
        %v338 = vld [vmem:[%s222 + $0x18] sm:$0xff]
        %v339 = vld [vmem:[%s222 + $0x20] sm:$0xff]
        %v340 = vld [vmem:[%s222 + $0x28] sm:$0xff]
        %v341 = vld [vmem:[%s222 + $0x30] sm:$0xff]
        %v342 = vld [vmem:[%s222 + $0x38] sm:$0xff]
        %v343 = vld [vmem:[%s222 + $0x40] sm:$0xff]
        %v344 = vld [vmem:[%s222 + $0x48] sm:$0xff]
        %v345 = vld [vmem:[%s222 + $0x50] sm:$0xff]
        %v346 = vld [vmem:[%s222 + $0x58] sm:$0xff]
        %v347 = vld [vmem:[%s222 + $0x60] sm:$0xff]
        %v348 = vld [vmem:[%s222 + $0x68] sm:$0xff]
        %v349 = vld [vmem:[%s222 + $0x70] sm:$0xff]
        %v350 = vld [vmem:[%s222 + $0x78] sm:$0xff]
        %v351 = vld [vmem:[%s222 + $0x80] sm:$0xff]
        %v352 = vld [vmem:[%s222 + $0x88] sm:$0xff]
        %v353 = vld [vmem:[%s222 + $0x90] sm:$0xff]
        %v354 = vld [vmem:[%s222 + $0x98] sm:$0xff]
        %v355 = vld [vmem:[%s222 + $0xa0] sm:$0xff]
        %v356 = vld [vmem:[%s222 + $0xa8] sm:$0xff]
        %v357 = vld [vmem:[%s222 + $0xb0] sm:$0xff]
        %v358 = vld [vmem:[%s222 + $0xb8] sm:$0xff]
        %v359 = vld [vmem:[%s222 + $0xc0] sm:$0xff]
        %v360 = vld [vmem:[%s222 + $0xc8] sm:$0xff]
        %v361 = vld [vmem:[%s222 + $0xd0] sm:$0xff]
        %v362 = vld [vmem:[%s222 + $0xd8] sm:$0xff]
        %v363 = vld [vmem:[%s222 + $0xe0] sm:$0xff]
        %v364 = vld [vmem:[%s222 + $0xe8] sm:$0xff]
        %v365 = vld [vmem:[%s222 + $0xf0] sm:$0xff]
        %v366 = vld [vmem:[%s222 + $0xf8] sm:$0xff]
        %v367 = vld [vmem:[#allocation6] sm:$0xf]
        %v368 = vld [vmem:[#allocation6 + $0x4] sm:$0xf]
        %v369 = vld [vmem:[#allocation6 + $0x8] sm:$0xf]
        %v370 = vld [vmem:[#allocation6 + $0xc] sm:$0xf]
        %v371 = vld [vmem:[#allocation6 + $0x10] sm:$0xf]
        %v372 = vld [vmem:[#allocation6 + $0x14] sm:$0xf]
        %v373 = vld [vmem:[#allocation6 + $0x18] sm:$0xf]
        %v374 = vld [vmem:[#allocation6 + $0x1c] sm:$0xf]
        %v375 = vld [vmem:[#allocation6 + $0x20] sm:$0xf]
        %v376 = vld [vmem:[#allocation6 + $0x24] sm:$0xf]
        %v377 = vld [vmem:[#allocation6 + $0x28] sm:$0xf]
        %v378 = vld [vmem:[#allocation6 + $0x2c] sm:$0xf]
        %v379 = vld [vmem:[#allocation6 + $0x30] sm:$0xf]
        %v380 = vld [vmem:[#allocation6 + $0x34] sm:$0xf]
        %v381 = vld [vmem:[#allocation6 + $0x38] sm:$0xf]
        %v382 = vld [vmem:[#allocation6 + $0x3c] sm:$0xf]
        %v383 = vld [vmem:[#allocation6 + $0x40] sm:$0xf]
        %v384 = vld [vmem:[#allocation6 + $0x44] sm:$0xf]
        %v385 = vld [vmem:[#allocation6 + $0x48] sm:$0xf]
        %v386 = vld [vmem:[#allocation6 + $0x4c] sm:$0xf]
        %v387 = vld [vmem:[#allocation6 + $0x50] sm:$0xf]
        %v388 = vld [vmem:[#allocation6 + $0x54] sm:$0xf]
        %v389 = vld [vmem:[#allocation6 + $0x58] sm:$0xf]
        %v390 = vld [vmem:[#allocation6 + $0x5c] sm:$0xf]
        %v391 = vld [vmem:[#allocation6 + $0x60] sm:$0xf]
        %v392 = vld [vmem:[#allocation6 + $0x64] sm:$0xf]
        %v393 = vld [vmem:[#allocation6 + $0x68] sm:$0xf]
        %v394 = vld [vmem:[#allocation6 + $0x6c] sm:$0xf]
        %v395 = vld [vmem:[#allocation6 + $0x70] sm:$0xf]
        %v396 = vld [vmem:[#allocation6 + $0x74] sm:$0xf]
        %v397 = vld [vmem:[#allocation6 + $0x78] sm:$0xf]
        %v398 = vld [vmem:[#allocation6 + $0x7c] sm:$0xf]
        %v431 = vunpack.c.l.b16 %v335
        %v432 = vunpack.c.h.b16 %v335
        %v433 = vunpack.c.l.b16 %v336
        %v434 = vunpack.c.h.b16 %v336
        %v435 = vunpack.c.l.b16 %v337
        %v436 = vunpack.c.h.b16 %v337
        %v437 = vunpack.c.l.b16 %v338
        %v438 = vunpack.c.h.b16 %v338
        %v439 = vunpack.c.l.b16 %v339
        %v440 = vunpack.c.h.b16 %v339
        %v441 = vunpack.c.l.b16 %v340
        %v442 = vunpack.c.h.b16 %v340
        %v443 = vunpack.c.l.b16 %v341
        %v444 = vunpack.c.h.b16 %v341
        %v445 = vunpack.c.l.b16 %v342
        %v446 = vunpack.c.h.b16 %v342
        %v447 = vunpack.c.l.b16 %v343
        %v448 = vunpack.c.h.b16 %v343
        %v449 = vunpack.c.l.b16 %v344
        %v450 = vunpack.c.h.b16 %v344
        %v451 = vunpack.c.l.b16 %v345
        %v452 = vunpack.c.h.b16 %v345
        %v453 = vunpack.c.l.b16 %v346
        %v454 = vunpack.c.h.b16 %v346
        %v455 = vunpack.c.l.b16 %v347
        %v456 = vunpack.c.h.b16 %v347
        %v457 = vunpack.c.l.b16 %v348
        %v458 = vunpack.c.h.b16 %v348
        %v459 = vunpack.c.l.b16 %v349
        %v460 = vunpack.c.h.b16 %v349
        %v461 = vunpack.c.l.b16 %v350
        %v462 = vunpack.c.h.b16 %v350
        %v463 = vunpack.c.l.b16 %v351
        %v464 = vunpack.c.h.b16 %v351
        %v465 = vunpack.c.l.b16 %v352
        %v466 = vunpack.c.h.b16 %v352
        %v467 = vunpack.c.l.b16 %v353
        %v468 = vunpack.c.h.b16 %v353
        %v469 = vunpack.c.l.b16 %v354
        %v470 = vunpack.c.h.b16 %v354
        %v471 = vunpack.c.l.b16 %v355
        %v472 = vunpack.c.h.b16 %v355
        %v473 = vunpack.c.l.b16 %v356
        %v474 = vunpack.c.h.b16 %v356
        %v475 = vunpack.c.l.b16 %v357
        %v476 = vunpack.c.h.b16 %v357
        %v477 = vunpack.c.l.b16 %v358
        %v478 = vunpack.c.h.b16 %v358
        %v479 = vunpack.c.l.b16 %v359
        %v480 = vunpack.c.h.b16 %v359
        %v481 = vunpack.c.l.b16 %v360
        %v482 = vunpack.c.h.b16 %v360
        %v483 = vunpack.c.l.b16 %v361
        %v484 = vunpack.c.h.b16 %v361
        %v485 = vunpack.c.l.b16 %v362
        %v486 = vunpack.c.h.b16 %v362
        %v487 = vunpack.c.l.b16 %v363
        %v488 = vunpack.c.h.b16 %v363
        %v489 = vunpack.c.l.b16 %v364
        %v490 = vunpack.c.h.b16 %v364
        %v491 = vunpack.c.l.b16 %v365
        %v492 = vunpack.c.h.b16 %v365
        %v493 = vunpack.c.l.b16 %v366
        %v494 = vunpack.c.h.b16 %v366
        %v495 = vpack.c.b16 %v433, %v431
        %v496 = vpack.c.b16 %v434, %v432
        %v497 = vpack.c.b16 %v437, %v435
        %v498 = vpack.c.b16 %v438, %v436
        %v499 = vpack.c.b16 %v441, %v439
        %v500 = vpack.c.b16 %v442, %v440
        %v501 = vpack.c.b16 %v445, %v443
        %v502 = vpack.c.b16 %v446, %v444
        %v503 = vpack.c.b16 %v449, %v447
        %v504 = vpack.c.b16 %v450, %v448
        %v505 = vpack.c.b16 %v453, %v451
        %v506 = vpack.c.b16 %v454, %v452
        %v507 = vpack.c.b16 %v457, %v455
        %v508 = vpack.c.b16 %v458, %v456
        %v509 = vpack.c.b16 %v461, %v459
        %v510 = vpack.c.b16 %v462, %v460
        %v511 = vpack.c.b16 %v465, %v463
        %v512 = vpack.c.b16 %v466, %v464
        %v513 = vpack.c.b16 %v469, %v467
        %v514 = vpack.c.b16 %v470, %v468
        %v515 = vpack.c.b16 %v473, %v471
        %v516 = vpack.c.b16 %v474, %v472
        %v517 = vpack.c.b16 %v477, %v475
        %v518 = vpack.c.b16 %v478, %v476
        %v519 = vpack.c.b16 %v481, %v479
        %v520 = vpack.c.b16 %v482, %v480
        %v521 = vpack.c.b16 %v485, %v483
        %v522 = vpack.c.b16 %v486, %v484
        %v523 = vpack.c.b16 %v489, %v487
        %v524 = vpack.c.b16 %v490, %v488
        %v525 = vpack.c.b16 %v493, %v491
        %v526 = vpack.c.b16 %v494, %v492
        %v591 = vunpack.c.l.b16 %v367
        %v592 = vunpack.c.l.b16 %v368
        %v593 = vunpack.c.l.b16 %v369
        %v594 = vunpack.c.l.b16 %v370
        %v595 = vunpack.c.l.b16 %v371
        %v596 = vunpack.c.l.b16 %v372
        %v597 = vunpack.c.l.b16 %v373
        %v598 = vunpack.c.l.b16 %v374
        %v599 = vunpack.c.l.b16 %v375
        %v600 = vunpack.c.l.b16 %v376
        %v601 = vunpack.c.l.b16 %v377
        %v602 = vunpack.c.l.b16 %v378
        %v603 = vunpack.c.l.b16 %v379
        %v604 = vunpack.c.l.b16 %v380
        %v605 = vunpack.c.l.b16 %v381
        %v606 = vunpack.c.l.b16 %v382
        %v607 = vunpack.c.l.b16 %v383
        %v608 = vunpack.c.l.b16 %v384
        %v609 = vunpack.c.l.b16 %v385
        %v610 = vunpack.c.l.b16 %v386
        %v611 = vunpack.c.l.b16 %v387
        %v612 = vunpack.c.l.b16 %v388
        %v613 = vunpack.c.l.b16 %v389
        %v614 = vunpack.c.l.b16 %v390
        %v615 = vunpack.c.l.b16 %v391
        %v616 = vunpack.c.l.b16 %v392
        %v617 = vunpack.c.l.b16 %v393
        %v618 = vunpack.c.l.b16 %v394
        %v619 = vunpack.c.l.b16 %v395
        %v620 = vunpack.c.l.b16 %v396
        %v621 = vunpack.c.l.b16 %v397
        %v622 = vunpack.c.l.b16 %v398
        %v623 = vpack.c.b16 %v592, %v591
        %v624 = vpack.c.b16 %v594, %v593
        %v625 = vpack.c.b16 %v596, %v595
        %v626 = vpack.c.b16 %v598, %v597
        %v627 = vpack.c.b16 %v600, %v599
        %v628 = vpack.c.b16 %v602, %v601
        %v629 = vpack.c.b16 %v604, %v603
        %v630 = vpack.c.b16 %v606, %v605
        %v631 = vpack.c.b16 %v608, %v607
        %v632 = vpack.c.b16 %v610, %v609
        %v633 = vpack.c.b16 %v612, %v611
        %v634 = vpack.c.b16 %v614, %v613
        %v635 = vpack.c.b16 %v616, %v615
        %v636 = vpack.c.b16 %v618, %v617
        %v637 = vpack.c.b16 %v620, %v619
        %v638 = vpack.c.b16 %v622, %v621
        %655 = vmatprep.subr.bf16.mxu0 0
        %656 = vmatpush1.bf16.msra.mxu0 %v623
        %657 = vmatprep.subr.bf16.mxu0 0
        %658 = vmatpush1.bf16.msra.mxu0 %v624
        %659 = vmatprep.subr.bf16.mxu0 0
        %660 = vmatpush1.bf16.msra.mxu0 %v625
        %661 = vmatprep.subr.bf16.mxu0 0
        %662 = vmatpush1.bf16.msra.mxu0 %v626
        %663 = vmatprep.subr.bf16.mxu0 0
        %664 = vmatpush1.bf16.msra.mxu0 %v627
        %665 = vmatprep.subr.bf16.mxu0 0
        %666 = vmatpush1.bf16.msra.mxu0 %v628
        %667 = vmatprep.subr.bf16.mxu0 0
        %668 = vmatpush1.bf16.msra.mxu0 %v629
        %669 = vmatprep.subr.bf16.mxu0 0
        %670 = vmatpush1.bf16.msra.mxu0 %v630
        %671 = vmatprep.subr.bf16.mxu0 0
        %672 = vmatpush1.bf16.msra.mxu0 %v631
        %673 = vmatprep.subr.bf16.mxu0 0
        %674 = vmatpush1.bf16.msra.mxu0 %v632
        %675 = vmatprep.subr.bf16.mxu0 0
        %676 = vmatpush1.bf16.msra.mxu0 %v633
        %677 = vmatprep.subr.bf16.mxu0 0
        %678 = vmatpush1.bf16.msra.mxu0 %v634
        %679 = vmatprep.subr.bf16.mxu0 0
        %680 = vmatpush1.bf16.msra.mxu0 %v635
        %681 = vmatprep.subr.bf16.mxu0 0
        %682 = vmatpush1.bf16.msra.mxu0 %v636
        %683 = vmatprep.subr.bf16.mxu0 0
        %684 = vmatpush1.bf16.msra.mxu0 %v637
        %685 = vmatprep.subr.bf16.mxu0 0
        %686 = vmatpush1.bf16.msra.mxu0 %v638
        %687 = vmatprep.mubr.bf16.mxu0 %v496
        %688 = vmatmul.mubr.bf16.gmra.mrb[0].mxu0 %v495
        %v689 = vpop.f32.mrb[0].mxu0
        %v690 = vadd.f32 0.0, %v689
        %v691 = vpop.f32.mrb[0].mxu0
        %v692 = vpop.f32.mrb[0].mxu0
        %v693 = vadd.f32 0.0, %v692
        %v694 = vpop.f32.mrb[0].mxu0
        %695 = vmatprep.mubr.bf16.mxu0 %v498
        %696 = vmatmul.mubr.bf16.gmra.mrb[0].mxu0 %v497
        %v697 = vpop.f32.mrb[0].mxu0
        %v698 = vadd.f32 0.0, %v697
        %v699 = vpop.f32.mrb[0].mxu0
        %v700 = vpop.f32.mrb[0].mxu0
        %v701 = vadd.f32 0.0, %v700
        %v702 = vpop.f32.mrb[0].mxu0
        %703 = vmatprep.mubr.bf16.mxu0 %v500
        %704 = vmatmul.mubr.bf16.gmra.mrb[0].mxu0 %v499
        %v705 = vpop.f32.mrb[0].mxu0
        %v706 = vadd.f32 0.0, %v705
        %v707 = vpop.f32.mrb[0].mxu0
        %v708 = vpop.f32.mrb[0].mxu0
        %v709 = vadd.f32 0.0, %v708
        %v710 = vpop.f32.mrb[0].mxu0
        %711 = vmatprep.mubr.bf16.mxu0 %v502
        %712 = vmatmul.mubr.bf16.gmra.mrb[0].mxu0 %v501
        %v713 = vpop.f32.mrb[0].mxu0
        %v714 = vadd.f32 0.0, %v713
        %v715 = vpop.f32.mrb[0].mxu0
        %v716 = vpop.f32.mrb[0].mxu0
        %v717 = vadd.f32 0.0, %v716
        %v718 = vpop.f32.mrb[0].mxu0
        %719 = vmatprep.mubr.bf16.mxu0 %v504
        %720 = vmatmul.mubr.bf16.gmra.mrb[0].mxu0 %v503
        %v721 = vpop.f32.mrb[0].mxu0
        %v722 = vadd.f32 0.0, %v721
        %v723 = vpop.f32.mrb[0].mxu0
        %v724 = vpop.f32.mrb[0].mxu0
        %v725 = vadd.f32 0.0, %v724
        %v726 = vpop.f32.mrb[0].mxu0
        %727 = vmatprep.mubr.bf16.mxu0 %v506
        %728 = vmatmul.mubr.bf16.gmra.mrb[0].mxu0 %v505
        %v729 = vpop.f32.mrb[0].mxu0
        %v730 = vadd.f32 0.0, %v729
        %v731 = vpop.f32.mrb[0].mxu0
        %v732 = vpop.f32.mrb[0].mxu0
        %v733 = vadd.f32 0.0, %v732
        %v734 = vpop.f32.mrb[0].mxu0
        %735 = vmatprep.mubr.bf16.mxu0 %v508
        %736 = vmatmul.mubr.bf16.gmra.mrb[0].mxu0 %v507
        %v737 = vpop.f32.mrb[0].mxu0
        %v738 = vadd.f32 0.0, %v737
        %v739 = vpop.f32.mrb[0].mxu0
        %v740 = vpop.f32.mrb[0].mxu0
        %v741 = vadd.f32 0.0, %v740
        %v742 = vpop.f32.mrb[0].mxu0
        %743 = vmatprep.mubr.bf16.mxu0 %v510
        %744 = vmatmul.mubr.bf16.gmra.mrb[0].mxu0 %v509
        %v745 = vpop.f32.mrb[0].mxu0
        %v746 = vadd.f32 0.0, %v745
        %v747 = vpop.f32.mrb[0].mxu0
        %v748 = vpop.f32.mrb[0].mxu0
        %v749 = vadd.f32 0.0, %v748
        %v750 = vpop.f32.mrb[0].mxu0
        %751 = vmatprep.mubr.bf16.mxu0 %v512
        %752 = vmatmul.mubr.bf16.gmra.mrb[0].mxu0 %v511
        %v753 = vpop.f32.mrb[0].mxu0
        %v754 = vadd.f32 0.0, %v753
        %v755 = vpop.f32.mrb[0].mxu0
        %v756 = vpop.f32.mrb[0].mxu0
        %v757 = vadd.f32 0.0, %v756
        %v758 = vpop.f32.mrb[0].mxu0
        %759 = vmatprep.mubr.bf16.mxu0 %v514
        %760 = vmatmul.mubr.bf16.gmra.mrb[0].mxu0 %v513
        %v761 = vpop.f32.mrb[0].mxu0
        %v762 = vadd.f32 0.0, %v761
        %v763 = vpop.f32.mrb[0].mxu0
        %v764 = vpop.f32.mrb[0].mxu0
        %v765 = vadd.f32 0.0, %v764
        %v766 = vpop.f32.mrb[0].mxu0
        %767 = vmatprep.mubr.bf16.mxu0 %v516
        %768 = vmatmul.mubr.bf16.gmra.mrb[0].mxu0 %v515
        %v769 = vpop.f32.mrb[0].mxu0
        %v770 = vadd.f32 0.0, %v769
        %v771 = vpop.f32.mrb[0].mxu0
        %v772 = vpop.f32.mrb[0].mxu0
        %v773 = vadd.f32 0.0, %v772
        %v774 = vpop.f32.mrb[0].mxu0
        %775 = vmatprep.mubr.bf16.mxu0 %v518
        %776 = vmatmul.mubr.bf16.gmra.mrb[0].mxu0 %v517
        %v777 = vpop.f32.mrb[0].mxu0
        %v778 = vadd.f32 0.0, %v777
        %v779 = vpop.f32.mrb[0].mxu0
        %v780 = vpop.f32.mrb[0].mxu0
        %v781 = vadd.f32 0.0, %v780
        %v782 = vpop.f32.mrb[0].mxu0
        %783 = vmatprep.mubr.bf16.mxu0 %v520
        %784 = vmatmul.mubr.bf16.gmra.mrb[0].mxu0 %v519
        %v785 = vpop.f32.mrb[0].mxu0
        %v786 = vadd.f32 0.0, %v785
        %v787 = vpop.f32.mrb[0].mxu0
        %v788 = vpop.f32.mrb[0].mxu0
        %v789 = vadd.f32 0.0, %v788
        %v790 = vpop.f32.mrb[0].mxu0
        %791 = vmatprep.mubr.bf16.mxu0 %v522
        %792 = vmatmul.mubr.bf16.gmra.mrb[0].mxu0 %v521
        %v793 = vpop.f32.mrb[0].mxu0
        %v794 = vadd.f32 0.0, %v793
        %v795 = vpop.f32.mrb[0].mxu0
        %v796 = vpop.f32.mrb[0].mxu0
        %v797 = vadd.f32 0.0, %v796
        %v798 = vpop.f32.mrb[0].mxu0
        %799 = vmatprep.mubr.bf16.mxu0 %v524
        %800 = vmatmul.mubr.bf16.gmra.mrb[0].mxu0 %v523
        %v801 = vpop.f32.mrb[0].mxu0
        %v802 = vadd.f32 0.0, %v801
        %v803 = vpop.f32.mrb[0].mxu0
        %v804 = vpop.f32.mrb[0].mxu0
        %v805 = vadd.f32 0.0, %v804
        %v806 = vpop.f32.mrb[0].mxu0
        %807 = vmatprep.mubr.bf16.mxu0 %v526
        %808 = vmatmul.mubr.bf16.gmra.mrb[0].mxu0 %v525
        %v809 = vpop.f32.mrb[0].mxu0
        %v810 = vadd.f32 0.0, %v809
        %v811 = vpop.f32.mrb[0].mxu0
        %v812 = vpop.f32.mrb[0].mxu0
        %v813 = vadd.f32 0.0, %v812
        %v814 = vpop.f32.mrb[0].mxu0
        %815 = vdwg.mxu0
        %v816 = vadd.f32 %v303, %v690
        %v817 = vadd.f32 %v304, %v693
        %v818 = vadd.f32 %v305, %v698
        %v819 = vadd.f32 %v306, %v701
        %v820 = vadd.f32 %v307, %v706
        %v821 = vadd.f32 %v308, %v709
        %v822 = vadd.f32 %v309, %v714
        %v823 = vadd.f32 %v310, %v717
        %v824 = vadd.f32 %v311, %v722
        %v825 = vadd.f32 %v312, %v725
        %v826 = vadd.f32 %v313, %v730
        %v827 = vadd.f32 %v314, %v733
        %v828 = vadd.f32 %v315, %v738
        %v829 = vadd.f32 %v316, %v741
        %v830 = vadd.f32 %v317, %v746
        %v831 = vadd.f32 %v318, %v749
        %v832 = vadd.f32 %v319, %v754
        %v833 = vadd.f32 %v320, %v757
        %v834 = vadd.f32 %v321, %v762
        %v835 = vadd.f32 %v322, %v765
        %v836 = vadd.f32 %v323, %v770
        %v837 = vadd.f32 %v324, %v773
        %v838 = vadd.f32 %v325, %v778
        %v839 = vadd.f32 %v326, %v781
        %v840 = vadd.f32 %v327, %v786
        %v841 = vadd.f32 %v328, %v789
        %v842 = vadd.f32 %v329, %v794
        %v843 = vadd.f32 %v330, %v797
        %v844 = vadd.f32 %v331, %v802
        %v845 = vadd.f32 %v332, %v805
        %v846 = vadd.f32 %v333, %v810
        %v847 = vadd.f32 %v334, %v813
        %848 = vst [vmem:[#allocation2] sm:$0xff] %v816
        %849 = vst [vmem:[#allocation2 + $0x8] sm:$0xff] %v817
        %850 = vst [vmem:[#allocation2 + $0x10] sm:$0xff] %v818
        %851 = vst [vmem:[#allocation2 + $0x18] sm:$0xff] %v819
        %852 = vst [vmem:[#allocation2 + $0x20] sm:$0xff] %v820
        %853 = vst [vmem:[#allocation2 + $0x28] sm:$0xff] %v821
        %854 = vst [vmem:[#allocation2 + $0x30] sm:$0xff] %v822
        %855 = vst [vmem:[#allocation2 + $0x38] sm:$0xff] %v823
        %856 = vst [vmem:[#allocation2 + $0x40] sm:$0xff] %v824
        %857 = vst [vmem:[#allocation2 + $0x48] sm:$0xff] %v825
        %858 = vst [vmem:[#allocation2 + $0x50] sm:$0xff] %v826
        %859 = vst [vmem:[#allocation2 + $0x58] sm:$0xff] %v827
        %860 = vst [vmem:[#allocation2 + $0x60] sm:$0xff] %v828
        %861 = vst [vmem:[#allocation2 + $0x68] sm:$0xff] %v829
        %862 = vst [vmem:[#allocation2 + $0x70] sm:$0xff] %v830
        %863 = vst [vmem:[#allocation2 + $0x78] sm:$0xff] %v831
        %864 = vst [vmem:[#allocation2 + $0x80] sm:$0xff] %v832
        %865 = vst [vmem:[#allocation2 + $0x88] sm:$0xff] %v833
        %866 = vst [vmem:[#allocation2 + $0x90] sm:$0xff] %v834
        %867 = vst [vmem:[#allocation2 + $0x98] sm:$0xff] %v835
        %868 = vst [vmem:[#allocation2 + $0xa0] sm:$0xff] %v836
        %869 = vst [vmem:[#allocation2 + $0xa8] sm:$0xff] %v837
        %870 = vst [vmem:[#allocation2 + $0xb0] sm:$0xff] %v838
        %871 = vst [vmem:[#allocation2 + $0xb8] sm:$0xff] %v839
        %872 = vst [vmem:[#allocation2 + $0xc0] sm:$0xff] %v840
        %873 = vst [vmem:[#allocation2 + $0xc8] sm:$0xff] %v841
        %874 = vst [vmem:[#allocation2 + $0xd0] sm:$0xff] %v842
        %875 = vst [vmem:[#allocation2 + $0xd8] sm:$0xff] %v843
        %876 = vst [vmem:[#allocation2 + $0xe0] sm:$0xff] %v844
        %877 = vst [vmem:[#allocation2 + $0xe8] sm:$0xff] %v845
        %878 = vst [vmem:[#allocation2 + $0xf0] sm:$0xff] %v846
        %879 = vst [vmem:[#allocation2 + $0xf8] sm:$0xff] %v847
        // Predicated region
        $region45: #{tpu_custom_call.1} parent=31 // pred_check
          %p880 = pneg %p260
        $region46: #{tpu_custom_call.1} parent=31 // pred_check_branch
          %882 = sbr.rel (%p880) target = $region48
        $region47: #{tpu_custom_call.1} parent=31 // pred_region
          %v883 = vld [vmem:[#allocation2] sm:$0xff]
          %v884 = vld [vmem:[#allocation2 + $0x8] sm:$0xff]
          %v885 = vld [vmem:[#allocation2 + $0x10] sm:$0xff]
          %v886 = vld [vmem:[#allocation2 + $0x18] sm:$0xff]
          %v887 = vld [vmem:[#allocation2 + $0x20] sm:$0xff]
          %v888 = vld [vmem:[#allocation2 + $0x28] sm:$0xff]
          %v889 = vld [vmem:[#allocation2 + $0x30] sm:$0xff]
          %v890 = vld [vmem:[#allocation2 + $0x38] sm:$0xff]
          %v891 = vld [vmem:[#allocation2 + $0x40] sm:$0xff]
          %v892 = vld [vmem:[#allocation2 + $0x48] sm:$0xff]
          %v893 = vld [vmem:[#allocation2 + $0x50] sm:$0xff]
          %v894 = vld [vmem:[#allocation2 + $0x58] sm:$0xff]
          %v895 = vld [vmem:[#allocation2 + $0x60] sm:$0xff]
          %v896 = vld [vmem:[#allocation2 + $0x68] sm:$0xff]
          %v897 = vld [vmem:[#allocation2 + $0x70] sm:$0xff]
          %v898 = vld [vmem:[#allocation2 + $0x78] sm:$0xff]
          %v899 = vld [vmem:[#allocation2 + $0x80] sm:$0xff]
          %v900 = vld [vmem:[#allocation2 + $0x88] sm:$0xff]
          %v901 = vld [vmem:[#allocation2 + $0x90] sm:$0xff]
          %v902 = vld [vmem:[#allocation2 + $0x98] sm:$0xff]
          %v903 = vld [vmem:[#allocation2 + $0xa0] sm:$0xff]
          %v904 = vld [vmem:[#allocation2 + $0xa8] sm:$0xff]
          %v905 = vld [vmem:[#allocation2 + $0xb0] sm:$0xff]
          %v906 = vld [vmem:[#allocation2 + $0xb8] sm:$0xff]
          %v907 = vld [vmem:[#allocation2 + $0xc0] sm:$0xff]
          %v908 = vld [vmem:[#allocation2 + $0xc8] sm:$0xff]
          %v909 = vld [vmem:[#allocation2 + $0xd0] sm:$0xff]
          %v910 = vld [vmem:[#allocation2 + $0xd8] sm:$0xff]
          %v911 = vld [vmem:[#allocation2 + $0xe0] sm:$0xff]
          %v912 = vld [vmem:[#allocation2 + $0xe8] sm:$0xff]
          %v913 = vld [vmem:[#allocation2 + $0xf0] sm:$0xff]
          %v914 = vld [vmem:[#allocation2 + $0xf8] sm:$0xff]
          %915 = vst [vmem:[%s251] sm:$0xff] %v883
          %916 = vst [vmem:[%s251 + $0x8] sm:$0xff] %v884
          %917 = vst [vmem:[%s251 + $0x10] sm:$0xff] %v885
          %918 = vst [vmem:[%s251 + $0x18] sm:$0xff] %v886
          %919 = vst [vmem:[%s251 + $0x20] sm:$0xff] %v887
          %920 = vst [vmem:[%s251 + $0x28] sm:$0xff] %v888
          %921 = vst [vmem:[%s251 + $0x30] sm:$0xff] %v889
          %922 = vst [vmem:[%s251 + $0x38] sm:$0xff] %v890
          %923 = vst [vmem:[%s251 + $0x40] sm:$0xff] %v891
          %924 = vst [vmem:[%s251 + $0x48] sm:$0xff] %v892
          %925 = vst [vmem:[%s251 + $0x50] sm:$0xff] %v893
          %926 = vst [vmem:[%s251 + $0x58] sm:$0xff] %v894
          %927 = vst [vmem:[%s251 + $0x60] sm:$0xff] %v895
          %928 = vst [vmem:[%s251 + $0x68] sm:$0xff] %v896
          %929 = vst [vmem:[%s251 + $0x70] sm:$0xff] %v897
          %930 = vst [vmem:[%s251 + $0x78] sm:$0xff] %v898
          %931 = vst [vmem:[%s251 + $0x80] sm:$0xff] %v899
          %932 = vst [vmem:[%s251 + $0x88] sm:$0xff] %v900
          %933 = vst [vmem:[%s251 + $0x90] sm:$0xff] %v901
          %934 = vst [vmem:[%s251 + $0x98] sm:$0xff] %v902
          %935 = vst [vmem:[%s251 + $0xa0] sm:$0xff] %v903
          %936 = vst [vmem:[%s251 + $0xa8] sm:$0xff] %v904
          %937 = vst [vmem:[%s251 + $0xb0] sm:$0xff] %v905
          %938 = vst [vmem:[%s251 + $0xb8] sm:$0xff] %v906
          %939 = vst [vmem:[%s251 + $0xc0] sm:$0xff] %v907
          %940 = vst [vmem:[%s251 + $0xc8] sm:$0xff] %v908
          %941 = vst [vmem:[%s251 + $0xd0] sm:$0xff] %v909
          %942 = vst [vmem:[%s251 + $0xd8] sm:$0xff] %v910
          %943 = vst [vmem:[%s251 + $0xe0] sm:$0xff] %v911
          %944 = vst [vmem:[%s251 + $0xe8] sm:$0xff] %v912
          %945 = vst [vmem:[%s251 + $0xf0] sm:$0xff] %v913
          %946 = vst [vmem:[%s251 + $0xf8] sm:$0xff] %v914
        $region48: #{tpu_custom_call.1} parent=31 // pred_fallthru
          _
        %s947 = sand.u32 %s132, 1
        %s948 = scalar_lea.sflag [#allocation5], %s947
        %s949 = sand.u32 %s132, 1
        %s950 = smul.addr %s949, 256
        %s951 = scalar_lea.vmem [#allocation8], %s950
        // Predicated region
        $region49: #{tpu_custom_call.1} parent=31 // pred_check
          %p952 = pneg %p142
        $region50: #{tpu_custom_call.1} parent=31 // pred_check_branch
          %954 = sbr.rel (%p952) target = $region52
        $region51: #{tpu_custom_call.1} parent=31 // pred_region
          %s955 = smul.u32 32, %s26
          %s957 = ssub.s32 4096, 4096
          %958 = vsyncadd %s948, %s957
          %s959 = sadd.s32 %s27, %s955
          %s960 = smul.addr %s959, 128
          %s961 = scalar_lea.hbm %s3, %s960
          %s962 = sshll.u32 %s951, 4
          %s963 = int_to_ptr.vmem [resolvable:$true] %s962
          %968 = dma.vmem_to_hbm [thread:$0]  %s963, 4096, %s961, %s948, 128, 128, 8
        $region52: #{tpu_custom_call.1} parent=31 // pred_fallthru
          _
      $region32: #{tpu_custom_call.1} parent=5 // pred_fallthru
        _
      %p969 = scmp.le.s32.totalorder 2, %s16
      // Predicated region
      $region53: #{tpu_custom_call.1} parent=5 // pred_check
        %p970 = pneg %p969
      $region54: #{tpu_custom_call.1} parent=5 // pred_check_branch
        %972 = sbr.rel (%p970) target = $region56
      $region55: #{tpu_custom_call.1} parent=5 // pred_region
        %s973 = ssub.s32 %s16, 2
        // Predicated region
        $region57: #{tpu_custom_call.1} parent=55 // pred_check
          %p974 = pneg %p148
        $region58: #{tpu_custom_call.1} parent=55 // pred_check_branch
          %976 = sbr.rel (%p974) target = $region60
        $region59: #{tpu_custom_call.1} parent=55 // pred_region
          %s977 = sand.u32 %s133, 1
          %s978 = scalar_lea.sflag [#allocation5], %s977
          %s979 = sand.u32 %s133, 1
          %s980 = smul.addr %s979, 256
          %s981 = scalar_lea.vmem [#allocation8], %s980
          %982 = dma.done %s978, 4096
        $region60: #{tpu_custom_call.1} parent=55 // pred_fallthru
          _
      $region56: #{tpu_custom_call.1} parent=5 // pred_fallthru
        _
    $region6: #{tpu_custom_call.1} parent=1 // loop_footer
      %s20 = sadd.s32 1, %s16
    $region7: #{tpu_custom_call.1} parent=1 // loop_footer_branch
      %15 = sbr.rel target = $region3
    $region8: #{tpu_custom_call.1} parent=1 // loop_exit
      _
    %983 = vsyncpa [#allocation4], 1
    %s984 = scalar_lea.sflag [#allocation4], 1
    %985 = vsyncpa %s984, 1
    %986 = vsyncpa [#allocation7], 1
    %987 = vsyncpa [#allocation5], 1
    %s988 = scalar_lea.sflag [#allocation5], 1
    %989 = vsyncpa %s988, 1

</llo_original>
